<compile_context>
chip_gen: v7x
topology: tpu7x:2x2x1
jax: 0.10.0
libtpu: 0.0.40
codegen_flags: <defaults>
</compile_context>

<pallas_src>
import jax
import jax.numpy as jnp
from jax import lax
from jax.experimental import pallas as pl
from jax.experimental.pallas import tpu as pltpu


# ---------------------------------------------------------------------------
# Kernel 1 (O(B*N)): node LayerNorm -> node_proj -> both halves of the first
# pair-MLP layer that depend only on a single node:
#   hi[b,n,:] = (LN(x[b,n]) @ Wp + bp) @ W1_i + b1   (n used as the i node)
#   hj[b,n,:] = (LN(x[b,n]) @ Wp + bp) @ W1_j        (n used as the j node)
# ---------------------------------------------------------------------------
def _node_prep_kernel(x_ref, g_ref, b_ref, pw_ref, pb_ref, w1i_ref, w1j_ref,
                      b1_ref, hi_ref, hj_ref):
    x = x_ref[...]                                        # [N, d_model] f32
    mu = jnp.mean(x, axis=-1, keepdims=True)
    var = jnp.mean((x - mu) ** 2, axis=-1, keepdims=True)
    xn = (x - mu) * lax.rsqrt(var + 1e-5)
    xn = xn * g_ref[...] + b_ref[...]                     # (1, d_model) broadcasts
    # bf16 operands on the MXU, f32 accumulation.
    msg = jnp.dot(xn.astype(jnp.bfloat16), pw_ref[...],
                  preferred_element_type=jnp.float32) + pb_ref[...]
    msg_bf = msg.astype(jnp.bfloat16)
    # Fold b1 into the i-side term: one fewer broadcast-add in the pair kernel.
    hi_ref[...] = jnp.dot(msg_bf, w1i_ref[...],
                          preferred_element_type=jnp.float32) + b1_ref[...]
    hj_ref[...] = jnp.dot(msg_bf, w1j_ref[...],
                          preferred_element_type=jnp.float32)


def node_prep(node_feats, ln_g, ln_b, proj_w_bf, proj_b, w1i_bf, w1j_bf, b1):
    B, N, d_model = node_feats.shape
    d_msg = proj_w_bf.shape[1]
    d_ff = w1i_bf.shape[1]
    return pl.pallas_call(
        _node_prep_kernel,
        out_shape=(jax.ShapeDtypeStruct((B, N, d_ff), jnp.float32),
                   jax.ShapeDtypeStruct((B, N, d_ff), jnp.float32)),
        grid_spec=pltpu.PrefetchScalarGridSpec(
            num_scalar_prefetch=0,
            grid=(B,),
            in_specs=[
                pl.BlockSpec((None, N, d_model), lambda b: (b, 0, 0)),
                pl.BlockSpec((1, d_model), lambda b: (0, 0)),
                pl.BlockSpec((1, d_model), lambda b: (0, 0)),
                pl.BlockSpec((d_model, d_msg), lambda b: (0, 0)),
                pl.BlockSpec((1, d_msg), lambda b: (0, 0)),
                pl.BlockSpec((d_msg, d_ff), lambda b: (0, 0)),
                pl.BlockSpec((d_msg, d_ff), lambda b: (0, 0)),
                pl.BlockSpec((1, d_ff), lambda b: (0, 0)),
            ],
            out_specs=[
                pl.BlockSpec((None, N, d_ff), lambda b: (b, 0, 0)),
                pl.BlockSpec((None, N, d_ff), lambda b: (b, 0, 0)),
            ],
        ),
        compiler_params=pltpu.CompilerParams(dimension_semantics=("parallel",)),
    )(node_feats, ln_g, ln_b, proj_w_bf, proj_b, w1i_bf, w1j_bf, b1)


# ---------------------------------------------------------------------------
# Kernel 2 (O(B*N^2)): fused pair kernel per (batch, i-tile)
#   h   = LN(e) @ w1_e + (hi + b1)[:,None,:] + hj[None,:,:]
#         + sum_s dot_s(i,j) * w1_c[s]
#   out = SiLU(h) @ w2 + b2
# ---------------------------------------------------------------------------
def _edge_msg_kernel(ci_ref, cjt_ref, hi_ref, hj_ref, edge_ref,
                     eg_ref, eb_ref, w1c_ref, w1e_ref, w2_ref, b2_ref,
                     o_ref):
    ti, n_nodes, d_edge = edge_ref.shape
    n_sets = ci_ref.shape[0]
    d_ff = hi_ref.shape[-1]
    d_out = o_ref.shape[-1]

    # ---- edge LayerNorm (f32) fused with its slice of the first Linear ----
    e = edge_ref[...]                                     # [ti, N, d_edge]
    emu = jnp.mean(e, axis=-1, keepdims=True)
    evar = jnp.mean((e - emu) ** 2, axis=-1, keepdims=True)
    en = (e - emu) * lax.rsqrt(evar + 1e-5)
    en = en * eg_ref[...] + eb_ref[...]                   # (1, d_edge) broadcasts
    en2 = en.reshape(ti * n_nodes, d_edge).astype(jnp.bfloat16)
    h = jnp.dot(en2, w1e_ref[...], preferred_element_type=jnp.float32)
    h = h.reshape(ti, n_nodes, d_ff)

    # ---- add precomputed per-node projections (b1 already folded into hi) ----
    h = h + hi_ref[...][:, None, :] + hj_ref[...][None, :, :]

    # ---- per-set coordinate dot products: 3 rank-1 VPU FMAs per set ----
    ci = ci_ref[...]                                      # [S, ti, 3]
    cj = cjt_ref[...]                                     # [S, 3, N]
    w1c = w1c_ref[...]                                    # [S, d_ff] f32
    for s in range(n_sets):
        d_s = (ci[s, :, 0:1] * cj[s, 0:1, :]
               + ci[s, :, 1:2] * cj[s, 1:2, :]
               + ci[s, :, 2:3] * cj[s, 2:3, :])           # [ti, N]
        h = h + d_s[:, :, None] * w1c[s, :][None, None, :]

    # ---- SiLU (f32; sigmoid goes to the EUP) + second Linear (bf16 MXU) ----
    h = h * jax.nn.sigmoid(h)
    out = jnp.dot(h.reshape(ti * n_nodes, d_ff).astype(jnp.bfloat16), w2_ref[...],
                  preferred_element_type=jnp.float32) + b2_ref[...]

    o_ref[...] = out.reshape(ti, n_nodes, d_out).astype(o_ref.dtype)


def edge_messages_pair_kernel(coords_n, hi, hj, edge_feats, eg, eb,
                              w1c, w1e_bf, w2_bf, b2, *, ti):
    B, S, N, _ = coords_n.shape
    d_ff = w1e_bf.shape[1]
    d_edge = edge_feats.shape[-1]
    d_out = w2_bf.shape[1]
    assert N % ti == 0
    coords_t = jnp.transpose(coords_n, (0, 1, 3, 2))      # [B, S, 3, N]

    return pl.pallas_call(
        _edge_msg_kernel,
        out_shape=jax.ShapeDtypeStruct((B, N, N, d_out), jnp.float32),
        grid_spec=pltpu.PrefetchScalarGridSpec(
            num_scalar_prefetch=0,
            grid=(B, N // ti),
            in_specs=[
                pl.BlockSpec((None, S, ti, 3), lambda b, i: (b, 0, i, 0)),
                pl.BlockSpec((None, S, 3, N), lambda b, i: (b, 0, 0, 0)),
                pl.BlockSpec((None, ti, d_ff), lambda b, i: (b, i, 0)),
                pl.BlockSpec((None, N, d_ff), lambda b, i: (b, 0, 0)),
                pl.BlockSpec((None, ti, N, d_edge), lambda b, i: (b, i, 0, 0)),
                pl.BlockSpec((1, d_edge), lambda b, i: (0, 0)),
                pl.BlockSpec((1, d_edge), lambda b, i: (0, 0)),
                pl.BlockSpec((S, d_ff), lambda b, i: (0, 0)),
                pl.BlockSpec((d_edge, d_ff), lambda b, i: (0, 0)),
                pl.BlockSpec((d_ff, d_out), lambda b, i: (0, 0)),
                pl.BlockSpec((1, d_out), lambda b, i: (0, 0)),
            ],
            out_specs=pl.BlockSpec((None, ti, N, d_out), lambda b, i: (b, i, 0, 0)),
        ),
        compiler_params=pltpu.CompilerParams(
            dimension_semantics=("parallel", "parallel"),
            vmem_limit_bytes=64 * 1024 * 1024,
        ),
    )(coords_n, coords_t, hi, hj, edge_feats, eg, eb, w1c, w1e_bf, w2_bf, b2)


# ---------------------------------------------------------------------------
# i-tile selection: biggest divisor of N whose double-buffered edge / output
# tiles plus live h temporaries fit a conservative VMEM budget (safe on v7x).
# ---------------------------------------------------------------------------
def _choose_ti(N, d_edge, d_out, d_ff, budget_bytes=24 * 1024 * 1024):
    def pad(x, m):
        return -(-x // m) * m

    n_pad = pad(N, 8)

    def tile_bytes(t):
        b = 2 * t * n_pad * pad(d_edge, 128) * 4   # edge input, double-buffered
        b += 2 * t * n_pad * pad(d_out, 128) * 4   # output, double-buffered
        b += 2 * t * n_pad * pad(d_ff, 128) * 4    # live h temporaries (rough)
        return b

    for cand in (128, 64, 32, 16, 8, 4, 2, 1):
        if cand <= N and N % cand == 0 and tile_bytes(cand) <= budget_bytes:
            return cand
    return 1


# ---------------------------------------------------------------------------
# Full forward: CoordNorm glue + the two Pallas kernels
# ---------------------------------------------------------------------------
def edge_messages_forward(params, coords, node_feats, node_mask, edge_feats,
                          *, ti=None):
    B, S, N, _ = coords.shape
    d_msg = params["proj_w"].shape[1]
    d_edge = edge_feats.shape[-1]
    d_ff = params["w1"].shape[1]
    d_out = params["w2"].shape[1]

    # --- CoordNorm(norm='none', zero_com=True): cheap O(B*S*N) glue ---
    mask = node_mask[..., None]                                      # [B,S,N,1]
    n_atoms = jnp.sum(node_mask, axis=-1, keepdims=True)[..., None]  # [B,S,1,1]
    com = jnp.sum(coords * mask, axis=2, keepdims=True) / n_atoms
    coords_n = (coords - com) * mask
    coords_n = coords_n * params["set_weights"]                      # [1,S,1,1]
    coords_n = coords_n * mask

    # --- split the first MLP layer row-wise by feature group ---
    # reference concat order: [msg_i | msg_j | coord_dots (S) | edge (d_edge)]
    w1 = params["w1"]
    w1_i = w1[:d_msg]
    w1_j = w1[d_msg:2 * d_msg]
    w1_c = w1[2 * d_msg:2 * d_msg + S]
    w1_e = w1[2 * d_msg + S:]

    bf = jnp.bfloat16
    hi, hj = node_prep(node_feats, params["node_ln_g"], params["node_ln_b"],
                       params["proj_w"].astype(bf), params["proj_b"],
                       w1_i.astype(bf), w1_j.astype(bf), params["b1"])

    if ti is None:
        ti = _choose_ti(N, d_edge, d_out, d_ff)

    return edge_messages_pair_kernel(
        coords_n, hi, hj, edge_feats,
        params["edge_ln_g"], params["edge_ln_b"],
        w1_c, w1_e.astype(bf),
        params["w2"].astype(bf), params["b2"], ti=ti)


# ---------------------------------------------------------------------------
# Pure-JAX reference (mirrors the PyTorch module) for a correctness check
# ---------------------------------------------------------------------------
def edge_messages_reference(params, coords, node_feats, node_mask, edge_feats):
    mask = node_mask[..., None]
    n_atoms = jnp.sum(node_mask, axis=-1, keepdims=True)[..., None]
    com = jnp.sum(coords * mask, axis=2, keepdims=True) / n_atoms
    cn = (coords - com) * mask
    cn = cn * params["set_weights"] * mask

    x = node_feats
    mu = jnp.mean(x, -1, keepdims=True)
    var = jnp.mean((x - mu) ** 2, -1, keepdims=True)
    xn = (x - mu) / jnp.sqrt(var + 1e-5) * params["node_ln_g"] + params["node_ln_b"]
    msg = xn @ params["proj_w"] + params["proj_b"]

    coord_feats = jnp.einsum("bsix,bsjx->bijs", cn, cn)

    e = edge_feats
    emu = jnp.mean(e, -1, keepdims=True)
    evar = jnp.mean((e - emu) ** 2, -1, keepdims=True)
    en = (e - emu) / jnp.sqrt(evar + 1e-5) * params["edge_ln_g"] + params["edge_ln_b"]

    B, N, _ = node_feats.shape
    d_msg = msg.shape[-1]
    feat_i = jnp.broadcast_to(msg[:, :, None, :], (B, N, N, d_msg))
    feat_j = jnp.broadcast_to(msg[:, None, :, :], (B, N, N, d_msg))
    pair = jnp.concatenate([feat_i, feat_j, coord_feats, en], axis=-1)
    h = pair @ params["w1"] + params["b1"]
    h = h * jax.nn.sigmoid(h)
    return h @ params["w2"] + params["b2"]


# ---------------------------------------------------------------------------
# Deterministic parameter init + example run
# ---------------------------------------------------------------------------
def init_params(key, d_model, d_message, d_out, n_coord_sets, d_ff, d_edge):
    ks = jax.random.split(key, 6)
    f_in = 2 * d_message + n_coord_sets + d_edge
    scale = 0.1
    return {
        "set_weights": jnp.ones((1, n_coord_sets, 1, 1), jnp.float32),
        "node_ln_g": jnp.ones((1, d_model), jnp.float32),
        "node_ln_b": jnp.zeros((1, d_model), jnp.float32),
        "edge_ln_g": jnp.ones((1, d_edge), jnp.float32),
        "edge_ln_b": jnp.zeros((1, d_edge), jnp.float32),
        "proj_w": scale * jax.random.normal(ks[0], (d_model, d_message), jnp.float32),
        "proj_b": scale * jax.random.normal(ks[1], (1, d_message), jnp.float32),
        "w1": scale * jax.random.normal(ks[2], (f_in, d_ff), jnp.float32),
        "b1": scale * jax.random.normal(ks[3], (1, d_ff), jnp.float32),
        "w2": scale * jax.random.normal(ks[4], (d_ff, d_out), jnp.float32),
        "b2": scale * jax.random.normal(ks[5], (1, d_out), jnp.float32),
    }


if __name__ == "__main__":
    B, S, N = 2, 4, 16
    d_model, d_message, d_ff, d_out, d_edge = 32, 16, 64, 32, 8

    key = jax.random.PRNGKey(0)
    k_param, k_coord, k_node, k_edge = jax.random.split(key, 4)

    params = init_params(k_param, d_model, d_message, d_out, S, d_ff, d_edge)

    coords = jax.random.normal(k_coord, (B, S, N, 3), jnp.float32)
    node_feats = jax.random.normal(k_node, (B, N, d_model), jnp.float32)
    edge_feats = jax.random.normal(k_edge, (B, N, N, d_edge), jnp.float32)
    # mask: all real except the last 3 nodes of batch 1
    node_mask = jnp.ones((B, S, N), jnp.float32)
    node_mask = node_mask.at[1, :, N - 3:].set(0.0)

    out = edge_messages_forward(params, coords, node_feats, node_mask, edge_feats)
    jax.block_until_ready(out)
    assert out.shape == (B, N, N, d_out)

    ref = edge_messages_reference(params, coords, node_feats, node_mask, edge_feats)
    # bf16 MXU operands vs f32 reference -> generous tolerance.
    assert bool(jnp.allclose(out, ref, atol=5e-2, rtol=5e-2))

    print("KERNEL_OK")
</pallas_src>

<mosaic_0001>
module attributes {stable_mosaic.version = 11 : i64} {
  func.func @_node_prep_kernel(%arg0: i32, %arg1: memref<1x16x32xf32, #tpu.memory_space<vmem>>, %arg2: memref<1x32xf32, #tpu.memory_space<vmem>>, %arg3: memref<1x32xf32, #tpu.memory_space<vmem>>, %arg4: memref<32x16xbf16, #tpu.memory_space<vmem>>, %arg5: memref<1x16xf32, #tpu.memory_space<vmem>>, %arg6: memref<16x64xbf16, #tpu.memory_space<vmem>>, %arg7: memref<16x64xbf16, #tpu.memory_space<vmem>>, %arg8: memref<1x64xf32, #tpu.memory_space<vmem>>, %arg9: memref<1x16x64xf32, #tpu.memory_space<vmem>>, %arg10: memref<1x16x64xf32, #tpu.memory_space<vmem>>) attributes {dimension_semantics = [#tpu.dimension_semantics<parallel>], iteration_bounds = array<i64: 2>, scalar_prefetch = 0 : i64, scratch_operands = 0 : i64, tpu.core_type = #tpu.core_type<tc>, window_params = [{transform_indices = @transform_0, window_bounds = array<i64: 1, 16, 32>}, {pipeline_mode = #tpu.pipeline_mode<synchronous>, transform_indices = @transform_1, window_bounds = array<i64: 1, 32>}, {pipeline_mode = #tpu.pipeline_mode<synchronous>, transform_indices = @transform_2, window_bounds = array<i64: 1, 32>}, {pipeline_mode = #tpu.pipeline_mode<synchronous>, transform_indices = @transform_3, window_bounds = array<i64: 32, 16>}, {pipeline_mode = #tpu.pipeline_mode<synchronous>, transform_indices = @transform_4, window_bounds = array<i64: 1, 16>}, {pipeline_mode = #tpu.pipeline_mode<synchronous>, transform_indices = @transform_5, window_bounds = array<i64: 16, 64>}, {pipeline_mode = #tpu.pipeline_mode<synchronous>, transform_indices = @transform_6, window_bounds = array<i64: 16, 64>}, {pipeline_mode = #tpu.pipeline_mode<synchronous>, transform_indices = @transform_7, window_bounds = array<i64: 1, 64>}, {transform_indices = @transform_8, window_bounds = array<i64: 1, 16, 64>}, {transform_indices = @transform_9, window_bounds = array<i64: 1, 16, 64>}]} {
    %c0 = arith.constant 0 : index
    %c0_0 = arith.constant 0 : index
    %c0_1 = arith.constant 0 : index
    %0 = vector.load %arg1[%c0, %c0_0, %c0_1] : memref<1x16x32xf32, #tpu.memory_space<vmem>>, vector<1x16x32xf32>
    %1 = vector.shape_cast %0 : vector<1x16x32xf32> to vector<16x32xf32>
    %cst = arith.constant dense<0.000000e+00> : vector<16xf32>
    %2 = vector.multi_reduction <add>, %1, %cst [1] : vector<16x32xf32> to vector<16xf32>
    %3 = vector.shape_cast %2 : vector<16xf32> to vector<16x1xf32>
    %cst_2 = arith.constant 3.200000e+01 : f32
    %4 = vector.broadcast %cst_2 : f32 to vector<16x1xf32>
    %5 = arith.divf %3, %4 : vector<16x1xf32>
    %6 = vector.broadcast %5 : vector<16x1xf32> to vector<16x32xf32>
    %7 = arith.subf %1, %6 : vector<16x32xf32>
    %8 = arith.mulf %7, %7 : vector<16x32xf32>
    %cst_3 = arith.constant dense<0.000000e+00> : vector<16xf32>
    %9 = vector.multi_reduction <add>, %8, %cst_3 [1] : vector<16x32xf32> to vector<16xf32>
    %10 = vector.shape_cast %9 : vector<16xf32> to vector<16x1xf32>
    %cst_4 = arith.constant 3.200000e+01 : f32
    %11 = vector.broadcast %cst_4 : f32 to vector<16x1xf32>
    %12 = arith.divf %10, %11 : vector<16x1xf32>
    %13 = vector.broadcast %5 : vector<16x1xf32> to vector<16x32xf32>
    %14 = arith.subf %1, %13 : vector<16x32xf32>
    %cst_5 = arith.constant 9.99999974E-6 : f32
    %15 = vector.broadcast %cst_5 : f32 to vector<16x1xf32>
    %16 = arith.addf %12, %15 : vector<16x1xf32>
    %17 = math.rsqrt %16 : vector<16x1xf32>
    %18 = vector.broadcast %17 : vector<16x1xf32> to vector<16x32xf32>
    %19 = arith.mulf %14, %18 : vector<16x32xf32>
    %c0_6 = arith.constant 0 : index
    %c0_7 = arith.constant 0 : index
    %20 = vector.load %arg2[%c0_6, %c0_7] : memref<1x32xf32, #tpu.memory_space<vmem>>, vector<1x32xf32>
    %21 = vector.broadcast %20 : vector<1x32xf32> to vector<16x32xf32>
    %22 = arith.mulf %19, %21 : vector<16x32xf32>
    %c0_8 = arith.constant 0 : index
    %c0_9 = arith.constant 0 : index
    %23 = vector.load %arg3[%c0_8, %c0_9] : memref<1x32xf32, #tpu.memory_space<vmem>>, vector<1x32xf32>
    %24 = vector.broadcast %23 : vector<1x32xf32> to vector<16x32xf32>
    %25 = arith.addf %22, %24 : vector<16x32xf32>
    %26 = arith.truncf %25 : vector<16x32xf32> to vector<16x32xbf16>
    %c0_10 = arith.constant 0 : index
    %c0_11 = arith.constant 0 : index
    %27 = vector.load %arg4[%c0_10, %c0_11] : memref<32x16xbf16, #tpu.memory_space<vmem>>, vector<32x16xbf16>
    %cst_12 = arith.constant dense<0.000000e+00> : vector<16x16xf32>
    %28 = tpu.matmul %26, %27, %cst_12 {dimension_numbers = #tpu.dot_dimension_numbers<[1], [0], [0], [1], [0, 0, 1, 1], [], []>} : vector<16x32xbf16>, vector<32x16xbf16>, vector<16x16xf32> -> vector<16x16xf32>
    %c0_13 = arith.constant 0 : index
    %c0_14 = arith.constant 0 : index
    %29 = vector.load %arg5[%c0_13, %c0_14] : memref<1x16xf32, #tpu.memory_space<vmem>>, vector<1x16xf32>
    %30 = vector.broadcast %29 : vector<1x16xf32> to vector<16x16xf32>
    %31 = arith.addf %28, %30 : vector<16x16xf32>
    %32 = arith.truncf %31 : vector<16x16xf32> to vector<16x16xbf16>
    %c0_15 = arith.constant 0 : index
    %c0_16 = arith.constant 0 : index
    %33 = vector.load %arg6[%c0_15, %c0_16] : memref<16x64xbf16, #tpu.memory_space<vmem>>, vector<16x64xbf16>
    %cst_17 = arith.constant dense<0.000000e+00> : vector<16x64xf32>
    %34 = tpu.matmul %32, %33, %cst_17 {dimension_numbers = #tpu.dot_dimension_numbers<[1], [0], [0], [1], [0, 0, 1, 1], [], []>} : vector<16x16xbf16>, vector<16x64xbf16>, vector<16x64xf32> -> vector<16x64xf32>
    %c0_18 = arith.constant 0 : index
    %c0_19 = arith.constant 0 : index
    %35 = vector.load %arg8[%c0_18, %c0_19] : memref<1x64xf32, #tpu.memory_space<vmem>>, vector<1x64xf32>
    %36 = vector.broadcast %35 : vector<1x64xf32> to vector<16x64xf32>
    %37 = arith.addf %34, %36 : vector<16x64xf32>
    %c0_20 = arith.constant 0 : index
    %c0_21 = arith.constant 0 : index
    %c0_22 = arith.constant 0 : index
    %38 = vector.load %arg9[%c0_20, %c0_21, %c0_22] : memref<1x16x64xf32, #tpu.memory_space<vmem>>, vector<1x16x64xf32>
    %39 = vector.shape_cast %38 : vector<1x16x64xf32> to vector<16x64xf32>
    %40 = vector.shape_cast %37 : vector<16x64xf32> to vector<1x16x64xf32>
    tpu.vector_store %arg9[%c0_20, %c0_21, %c0_22], %40 {strides = array<i32>} : memref<1x16x64xf32, #tpu.memory_space<vmem>>, vector<1x16x64xf32>,
    %c0_23 = arith.constant 0 : index
    %c0_24 = arith.constant 0 : index
    %41 = vector.load %arg7[%c0_23, %c0_24] : memref<16x64xbf16, #tpu.memory_space<vmem>>, vector<16x64xbf16>
    %cst_25 = arith.constant dense<0.000000e+00> : vector<16x64xf32>
    %42 = tpu.matmul %32, %41, %cst_25 {dimension_numbers = #tpu.dot_dimension_numbers<[1], [0], [0], [1], [0, 0, 1, 1], [], []>} : vector<16x16xbf16>, vector<16x64xbf16>, vector<16x64xf32> -> vector<16x64xf32>
    %c0_26 = arith.constant 0 : index
    %c0_27 = arith.constant 0 : index
    %c0_28 = arith.constant 0 : index
    %43 = vector.load %arg10[%c0_26, %c0_27, %c0_28] : memref<1x16x64xf32, #tpu.memory_space<vmem>>, vector<1x16x64xf32>
    %44 = vector.shape_cast %43 : vector<1x16x64xf32> to vector<16x64xf32>
    %45 = vector.shape_cast %42 : vector<16x64xf32> to vector<1x16x64xf32>
    tpu.vector_store %arg10[%c0_26, %c0_27, %c0_28], %45 {strides = array<i32>} : memref<1x16x64xf32, #tpu.memory_space<vmem>>, vector<1x16x64xf32>,
    return
  }
  func.func @transform_0(%arg0: i32) -> (i32, i32, i32) {
    %c0_i32 = arith.constant 0 : i32
    %c0_i32_0 = arith.constant 0 : i32
    %c0_i32_1 = arith.constant 0 : i32
    return %arg0, %c0_i32, %c0_i32_0 : i32, i32, i32
  }
  func.func @transform_1(%arg0: i32) -> (i32, i32) {
    %c0_i32 = arith.constant 0 : i32
    %c0_i32_0 = arith.constant 0 : i32
    %c0_i32_1 = arith.constant 0 : i32
    return %c0_i32, %c0_i32_0 : i32, i32
  }
  func.func @transform_2(%arg0: i32) -> (i32, i32) {
    %c0_i32 = arith.constant 0 : i32
    %c0_i32_0 = arith.constant 0 : i32
    %c0_i32_1 = arith.constant 0 : i32
    return %c0_i32, %c0_i32_0 : i32, i32
  }
  func.func @transform_3(%arg0: i32) -> (i32, i32) {
    %c0_i32 = arith.constant 0 : i32
    %c0_i32_0 = arith.constant 0 : i32
    %c0_i32_1 = arith.constant 0 : i32
    return %c0_i32, %c0_i32_0 : i32, i32
  }
  func.func @transform_4(%arg0: i32) -> (i32, i32) {
    %c0_i32 = arith.constant 0 : i32
    %c0_i32_0 = arith.constant 0 : i32
    %c0_i32_1 = arith.constant 0 : i32
    return %c0_i32, %c0_i32_0 : i32, i32
  }
  func.func @transform_5(%arg0: i32) -> (i32, i32) {
    %c0_i32 = arith.constant 0 : i32
    %c0_i32_0 = arith.constant 0 : i32
    %c0_i32_1 = arith.constant 0 : i32
    return %c0_i32, %c0_i32_0 : i32, i32
  }
  func.func @transform_6(%arg0: i32) -> (i32, i32) {
    %c0_i32 = arith.constant 0 : i32
    %c0_i32_0 = arith.constant 0 : i32
    %c0_i32_1 = arith.constant 0 : i32
    return %c0_i32, %c0_i32_0 : i32, i32
  }
  func.func @transform_7(%arg0: i32) -> (i32, i32) {
    %c0_i32 = arith.constant 0 : i32
    %c0_i32_0 = arith.constant 0 : i32
    %c0_i32_1 = arith.constant 0 : i32
    return %c0_i32, %c0_i32_0 : i32, i32
  }
  func.func @transform_8(%arg0: i32) -> (i32, i32, i32) {
    %c0_i32 = arith.constant 0 : i32
    %c0_i32_0 = arith.constant 0 : i32
    %c0_i32_1 = arith.constant 0 : i32
    return %arg0, %c0_i32, %c0_i32_0 : i32, i32, i32
  }
  func.func @transform_9(%arg0: i32) -> (i32, i32, i32) {
    %c0_i32 = arith.constant 0 : i32
    %c0_i32_0 = arith.constant 0 : i32
    %c0_i32_1 = arith.constant 0 : i32
    return %arg0, %c0_i32, %c0_i32_0 : i32, i32, i32
  }
}

</mosaic_0001>

<llo_original>
// kernel: tpu_custom_call.1
$region0: #{tpu_custom_call.1}
  #allocation0 [shape = 'u32[]', space=smem, size = 0x4, offset = 0x4, fixed_abs, tag = 'smem constant byte address 0x4 - core index']
  #allocation1 [shape = 'u32[144,128]{1,0:T(1,128)}', space=vmem, size = 0x12000, scoped, tag = 'internal scratch']
  %s0 = inlined_call_operand.hbm [shape: f32[2,16,32], index: 0, kind: input, shape index: {}]
  %s1 = inlined_call_operand.vmem [shape: f32[1,32], index: 1, kind: input, shape index: {}]
  %s2 = inlined_call_operand.vmem [shape: f32[1,32], index: 2, kind: input, shape index: {}]
  %s3 = inlined_call_operand.vmem [shape: bf16[32,16], index: 3, kind: input, shape index: {}]
  %s4 = inlined_call_operand.vmem [shape: f32[1,16], index: 4, kind: input, shape index: {}]
  %s5 = inlined_call_operand.vmem [shape: bf16[16,64], index: 5, kind: input, shape index: {}]
  %s6 = inlined_call_operand.vmem [shape: bf16[16,64], index: 6, kind: input, shape index: {}]
  %s7 = inlined_call_operand.vmem [shape: f32[1,64], index: 7, kind: input, shape index: {}]
  %s8 = inlined_call_operand.hbm [shape: f32[2,16,64], index: 8, kind: output, shape index: {0}]
  %s9 = inlined_call_operand.hbm [shape: f32[2,16,64], index: 9, kind: output, shape index: {1}]
  %10 = xla_tuple %s8, %s9
  %s11 = sld [smem:[#allocation0]]
  $region77: #{tpu_custom_call.1} parent=0
    _
  %s13 = ssub.s32 1, %s11
  %s14 = scalar_select 0, %s13, %s11
  $region1: #{tpu_custom_call.1} parent=0
    #allocation2 [shape = 'u8[16384]{0}', space=vmem, size = 0x4000, scoped, tag = 'input window, operand 0']
    #allocation3 [shape = 's32[2]{0}', space=sflag, size = 0x8, scoped, tag = 'scoped memory for tpu_custom_call.1']
    #allocation4 [shape = 's32[2]{0}', space=sflag, size = 0x8, scoped, tag = 'scoped memory for tpu_custom_call.1']
    #allocation5 [shape = 'u8[16384]{0}', space=vmem, size = 0x4000, scoped, tag = 'output window, operand 0']
    #allocation6 [shape = 'u8[16384]{0}', space=vmem, size = 0x4000, scoped, tag = 'output window, operand 1']
    #allocation7 [shape = 's32[2]{0}', space=sflag, size = 0x8, scoped, tag = 'scoped memory for tpu_custom_call.1']
    %15 = vsyncpa [#allocation3], 0
    %s16 = scalar_lea.sflag [#allocation3], 1
    %17 = vsyncpa %s16, 0
    %18 = vsyncpa [#allocation4], 0
    %s19 = scalar_lea.sflag [#allocation4], 1
    %20 = vsyncpa %s19, 0
    %21 = vsyncpa [#allocation7], 0
    %s22 = scalar_lea.sflag [#allocation7], 1
    %23 = vsyncpa %s22, 0
    loop: start=0, step=1, limit=4
    $region2: #{tpu_custom_call.1} parent=1 // loop_pre_header
      _
    $region3: #{tpu_custom_call.1} parent=1 // loop_header
      %s25 = sphi 0, %s29
      %p26 = scmp.ge.s32.totalorder %s25, 4
      %s35 = sphi 0, %s37
      %s38 = sphi 0, %s35
      %s39 = sphi 0, %s38
      %s55 = sphi 0, %s39
      %s59 = sphi 0, %s59
      %s61 = sphi 0, %s59
      %s62 = sphi 0, %s61
      %s76 = sphi 0, %s62
      %s80 = sphi 0, %s80
      %s82 = sphi 0, %s80
      %s83 = sphi 0, %s82
      %s97 = sphi 0, %s83
      %s101 = sphi 0, %s101
      %s103 = sphi 0, %s101
      %s104 = sphi 0, %s103
      %s118 = sphi 0, %s104
      %s122 = sphi 0, %s122
      %s124 = sphi 0, %s122
      %s125 = sphi 0, %s124
      %s139 = sphi 0, %s125
      %s143 = sphi 0, %s143
      %s145 = sphi 0, %s143
      %s146 = sphi 0, %s145
      %s160 = sphi 0, %s146
      %s164 = sphi 0, %s164
      %s166 = sphi 0, %s164
      %s167 = sphi 0, %s166
      %s181 = sphi 0, %s167
      %s185 = sphi 0, %s185
      %s187 = sphi 0, %s185
      %s188 = sphi 0, %s187
      %s202 = sphi 0, %s188
      %s208 = sphi 0, %s210
      %s211 = sphi 0, %s208
      %s212 = sphi 0, %s211
      %s228 = sphi 0, %s212
      %s234 = sphi 0, %s236
      %s237 = sphi 0, %s234
      %s238 = sphi 0, %s237
      %s254 = sphi 0, %s238
    $region4: #{tpu_custom_call.1} parent=1 // loop_header_branch
      %28 = sbr.rel (%p26) target = $region8
    $region5: #{tpu_custom_call.1} parent=1 // loop_body
      %s30 = ssub.s32 %s25, 1
      %s31 = ssub.s32 %s25, 2
      %s32 = sadd.s32 %s25, 1
      %s33 = ssub.s32 %s25, %s32
      %p34 = scmp.eq.s32.totalorder %s33, 0
      %s36 = sadd.s32 %s35, 1
      %s37 = scalar_select %p34, %s35, %s36
      %p40 = pneg %p34
      %p41 = scmp.eq.s32.totalorder %s25, 1
      %p42 = por %p40, %p41
      %p43 = scmp.ne.s32.totalorder %s35, %s38
      %p44 = scmp.eq.s32.totalorder %s25, 0
      %p45 = por %p43, %p44
      %p46 = scmp.ne.s32.totalorder %s35, %s38
      %p47 = scmp.eq.s32.totalorder %s30, 1
      %p48 = por %p46, %p47
      %p49 = scmp.ne.s32.totalorder %s38, %s39
      %p50 = scmp.eq.s32.totalorder %s30, 0
      %p51 = por %p49, %p50
      %p52 = scmp.ne.s32.totalorder %s38, %s39
      %p53 = scmp.eq.s32.totalorder %s31, 1
      %p54 = por %p52, %p53
      %p56 = scmp.ne.s32.totalorder %s39, %s55
      %p57 = scmp.eq.s32.totalorder %s31, 0
      %p58 = por %p56, %p57
      %s60 = sadd.s32 %s59, 1
      %p63 = scmp.eq.s32.totalorder %s25, 1
      %p64 = scmp.ne.s32.totalorder %s59, %s61
      %p65 = scmp.eq.s32.totalorder %s25, 0
      %p66 = por %p64, %p65
      %p67 = scmp.ne.s32.totalorder %s59, %s61
      %p68 = scmp.eq.s32.totalorder %s30, 1
      %p69 = por %p67, %p68
      %p70 = scmp.ne.s32.totalorder %s61, %s62
      %p71 = scmp.eq.s32.totalorder %s30, 0
      %p72 = por %p70, %p71
      %p73 = scmp.ne.s32.totalorder %s61, %s62
      %p74 = scmp.eq.s32.totalorder %s31, 1
      %p75 = por %p73, %p74
      %p77 = scmp.ne.s32.totalorder %s62, %s76
      %p78 = scmp.eq.s32.totalorder %s31, 0
      %p79 = por %p77, %p78
      %s81 = sadd.s32 %s80, 1
      %p84 = scmp.eq.s32.totalorder %s25, 1
      %p85 = scmp.ne.s32.totalorder %s80, %s82
      %p86 = scmp.eq.s32.totalorder %s25, 0
      %p87 = por %p85, %p86
      %p88 = scmp.ne.s32.totalorder %s80, %s82
      %p89 = scmp.eq.s32.totalorder %s30, 1
      %p90 = por %p88, %p89
      %p91 = scmp.ne.s32.totalorder %s82, %s83
      %p92 = scmp.eq.s32.totalorder %s30, 0
      %p93 = por %p91, %p92
      %p94 = scmp.ne.s32.totalorder %s82, %s83
      %p95 = scmp.eq.s32.totalorder %s31, 1
      %p96 = por %p94, %p95
      %p98 = scmp.ne.s32.totalorder %s83, %s97
      %p99 = scmp.eq.s32.totalorder %s31, 0
      %p100 = por %p98, %p99
      %s102 = sadd.s32 %s101, 1
      %p105 = scmp.eq.s32.totalorder %s25, 1
      %p106 = scmp.ne.s32.totalorder %s101, %s103
      %p107 = scmp.eq.s32.totalorder %s25, 0
      %p108 = por %p106, %p107
      %p109 = scmp.ne.s32.totalorder %s101, %s103
      %p110 = scmp.eq.s32.totalorder %s30, 1
      %p111 = por %p109, %p110
      %p112 = scmp.ne.s32.totalorder %s103, %s104
      %p113 = scmp.eq.s32.totalorder %s30, 0
      %p114 = por %p112, %p113
      %p115 = scmp.ne.s32.totalorder %s103, %s104
      %p116 = scmp.eq.s32.totalorder %s31, 1
      %p117 = por %p115, %p116
      %p119 = scmp.ne.s32.totalorder %s104, %s118
      %p120 = scmp.eq.s32.totalorder %s31, 0
      %p121 = por %p119, %p120
      %s123 = sadd.s32 %s122, 1
      %p126 = scmp.eq.s32.totalorder %s25, 1
      %p127 = scmp.ne.s32.totalorder %s122, %s124
      %p128 = scmp.eq.s32.totalorder %s25, 0
      %p129 = por %p127, %p128
      %p130 = scmp.ne.s32.totalorder %s122, %s124
      %p131 = scmp.eq.s32.totalorder %s30, 1
      %p132 = por %p130, %p131
      %p133 = scmp.ne.s32.totalorder %s124, %s125
      %p134 = scmp.eq.s32.totalorder %s30, 0
      %p135 = por %p133, %p134
      %p136 = scmp.ne.s32.totalorder %s124, %s125
      %p137 = scmp.eq.s32.totalorder %s31, 1
      %p138 = por %p136, %p137
      %p140 = scmp.ne.s32.totalorder %s125, %s139
      %p141 = scmp.eq.s32.totalorder %s31, 0
      %p142 = por %p140, %p141
      %s144 = sadd.s32 %s143, 1
      %p147 = scmp.eq.s32.totalorder %s25, 1
      %p148 = scmp.ne.s32.totalorder %s143, %s145
      %p149 = scmp.eq.s32.totalorder %s25, 0
      %p150 = por %p148, %p149
      %p151 = scmp.ne.s32.totalorder %s143, %s145
      %p152 = scmp.eq.s32.totalorder %s30, 1
      %p153 = por %p151, %p152
      %p154 = scmp.ne.s32.totalorder %s145, %s146
      %p155 = scmp.eq.s32.totalorder %s30, 0
      %p156 = por %p154, %p155
      %p157 = scmp.ne.s32.totalorder %s145, %s146
      %p158 = scmp.eq.s32.totalorder %s31, 1
      %p159 = por %p157, %p158
      %p161 = scmp.ne.s32.totalorder %s146, %s160
      %p162 = scmp.eq.s32.totalorder %s31, 0
      %p163 = por %p161, %p162
      %s165 = sadd.s32 %s164, 1
      %p168 = scmp.eq.s32.totalorder %s25, 1
      %p169 = scmp.ne.s32.totalorder %s164, %s166
      %p170 = scmp.eq.s32.totalorder %s25, 0
      %p171 = por %p169, %p170
      %p172 = scmp.ne.s32.totalorder %s164, %s166
      %p173 = scmp.eq.s32.totalorder %s30, 1
      %p174 = por %p172, %p173
      %p175 = scmp.ne.s32.totalorder %s166, %s167
      %p176 = scmp.eq.s32.totalorder %s30, 0
      %p177 = por %p175, %p176
      %p178 = scmp.ne.s32.totalorder %s166, %s167
      %p179 = scmp.eq.s32.totalorder %s31, 1
      %p180 = por %p178, %p179
      %p182 = scmp.ne.s32.totalorder %s167, %s181
      %p183 = scmp.eq.s32.totalorder %s31, 0
      %p184 = por %p182, %p183
      %s186 = sadd.s32 %s185, 1
      %p189 = scmp.eq.s32.totalorder %s25, 1
      %p190 = scmp.ne.s32.totalorder %s185, %s187
      %p191 = scmp.eq.s32.totalorder %s25, 0
      %p192 = por %p190, %p191
      %p193 = scmp.ne.s32.totalorder %s185, %s187
      %p194 = scmp.eq.s32.totalorder %s30, 1
      %p195 = por %p193, %p194
      %p196 = scmp.ne.s32.totalorder %s187, %s188
      %p197 = scmp.eq.s32.totalorder %s30, 0
      %p198 = por %p196, %p197
      %p199 = scmp.ne.s32.totalorder %s187, %s188
      %p200 = scmp.eq.s32.totalorder %s31, 1
      %p201 = por %p199, %p200
      %p203 = scmp.ne.s32.totalorder %s188, %s202
      %p204 = scmp.eq.s32.totalorder %s31, 0
      %p205 = por %p203, %p204
      %s206 = ssub.s32 %s25, %s32
      %p207 = scmp.eq.s32.totalorder %s206, 0
      %s209 = sadd.s32 %s208, 1
      %s210 = scalar_select %p207, %s208, %s209
      %p213 = pneg %p207
      %p214 = scmp.eq.s32.totalorder %s25, 1
      %p215 = por %p213, %p214
      %p216 = scmp.ne.s32.totalorder %s208, %s211
      %p217 = scmp.eq.s32.totalorder %s25, 0
      %p218 = por %p216, %p217
      %p219 = scmp.ne.s32.totalorder %s208, %s211
      %p220 = scmp.eq.s32.totalorder %s30, 1
      %p221 = por %p219, %p220
      %p222 = scmp.ne.s32.totalorder %s211, %s212
      %p223 = scmp.eq.s32.totalorder %s30, 0
      %p224 = por %p222, %p223
      %p225 = scmp.ne.s32.totalorder %s211, %s212
      %p226 = scmp.eq.s32.totalorder %s31, 1
      %p227 = por %p225, %p226
      %p229 = scmp.ne.s32.totalorder %s212, %s228
      %p230 = scmp.eq.s32.totalorder %s31, 0
      %p231 = por %p229, %p230
      %s232 = ssub.s32 %s25, %s32
      %p233 = scmp.eq.s32.totalorder %s232, 0
      %s235 = sadd.s32 %s234, 1
      %s236 = scalar_select %p233, %s234, %s235
      %p239 = pneg %p233
      %p240 = scmp.eq.s32.totalorder %s25, 1
      %p241 = por %p239, %p240
      %p242 = scmp.ne.s32.totalorder %s234, %s237
      %p243 = scmp.eq.s32.totalorder %s25, 0
      %p244 = por %p242, %p243
      %p245 = scmp.ne.s32.totalorder %s234, %s237
      %p246 = scmp.eq.s32.totalorder %s30, 1
      %p247 = por %p245, %p246
      %p248 = scmp.ne.s32.totalorder %s237, %s238
      %p249 = scmp.eq.s32.totalorder %s30, 0
      %p250 = por %p248, %p249
      %p251 = scmp.ne.s32.totalorder %s237, %s238
      %p252 = scmp.eq.s32.totalorder %s31, 1
      %p253 = por %p251, %p252
      %p255 = scmp.ne.s32.totalorder %s238, %s254
      %p256 = scmp.eq.s32.totalorder %s31, 0
      %p257 = por %p255, %p256
      %p258 = scmp.le.s32.totalorder 1, %s25
      %p259 = scmp.lt.s32.totalorder %s25, 3
      %p260 = pnand %p258, %p259
      %p261 = pneg %p260
      // Predicated region
      $region9: #{tpu_custom_call.1} parent=5 // pred_check
        _
      $region10: #{tpu_custom_call.1} parent=5 // pred_check_branch
        %263 = sbr.rel (%p260) target = $region12
      $region11: #{tpu_custom_call.1} parent=5 // pred_region
        %s264 = ssub.s32 %s25, 1
        // Predicated region
        $region13: #{tpu_custom_call.1} parent=11 // pred_check
          %p265 = pneg %p72
        $region14: #{tpu_custom_call.1} parent=11 // pred_check_branch
          %267 = sbr.rel (%p265) target = $region16
        $region15: #{tpu_custom_call.1} parent=11 // pred_region
          _
        $region16: #{tpu_custom_call.1} parent=11 // pred_fallthru
          _
        // Predicated region
        $region17: #{tpu_custom_call.1} parent=11 // pred_check
          %p268 = pneg %p93
        $region18: #{tpu_custom_call.1} parent=11 // pred_check_branch
          %270 = sbr.rel (%p268) target = $region20
        $region19: #{tpu_custom_call.1} parent=11 // pred_region
          _
        $region20: #{tpu_custom_call.1} parent=11 // pred_fallthru
          _
        // Predicated region
        $region21: #{tpu_custom_call.1} parent=11 // pred_check
          %p271 = pneg %p114
        $region22: #{tpu_custom_call.1} parent=11 // pred_check_branch
          %273 = sbr.rel (%p271) target = $region24
        $region23: #{tpu_custom_call.1} parent=11 // pred_region
          _
        $region24: #{tpu_custom_call.1} parent=11 // pred_fallthru
          _
        // Predicated region
        $region25: #{tpu_custom_call.1} parent=11 // pred_check
          %p274 = pneg %p135
        $region26: #{tpu_custom_call.1} parent=11 // pred_check_branch
          %276 = sbr.rel (%p274) target = $region28
        $region27: #{tpu_custom_call.1} parent=11 // pred_region
          _
        $region28: #{tpu_custom_call.1} parent=11 // pred_fallthru
          _
        // Predicated region
        $region29: #{tpu_custom_call.1} parent=11 // pred_check
          %p277 = pneg %p156
        $region30: #{tpu_custom_call.1} parent=11 // pred_check_branch
          %279 = sbr.rel (%p277) target = $region32
        $region31: #{tpu_custom_call.1} parent=11 // pred_region
          _
        $region32: #{tpu_custom_call.1} parent=11 // pred_fallthru
          _
        // Predicated region
        $region33: #{tpu_custom_call.1} parent=11 // pred_check
          %p280 = pneg %p177
        $region34: #{tpu_custom_call.1} parent=11 // pred_check_branch
          %282 = sbr.rel (%p280) target = $region36
        $region35: #{tpu_custom_call.1} parent=11 // pred_region
          _
        $region36: #{tpu_custom_call.1} parent=11 // pred_fallthru
          _
        // Predicated region
        $region37: #{tpu_custom_call.1} parent=11 // pred_check
          %p283 = pneg %p198
        $region38: #{tpu_custom_call.1} parent=11 // pred_check_branch
          %285 = sbr.rel (%p283) target = $region40
        $region39: #{tpu_custom_call.1} parent=11 // pred_region
          _
        $region40: #{tpu_custom_call.1} parent=11 // pred_fallthru
          _
      $region12: #{tpu_custom_call.1} parent=5 // pred_fallthru
        _
      %p286 = scmp.lt.s32.totalorder %s25, 2
      // Predicated region
      $region41: #{tpu_custom_call.1} parent=5 // pred_check
        %p287 = pneg %p286
      $region42: #{tpu_custom_call.1} parent=5 // pred_check_branch
        %289 = sbr.rel (%p287) target = $region44
      $region43: #{tpu_custom_call.1} parent=5 // pred_region
        // Predicated region
        $region45: #{tpu_custom_call.1} parent=43 // pred_check
          %p290 = pneg %p45
        $region46: #{tpu_custom_call.1} parent=43 // pred_check_branch
          %292 = sbr.rel (%p290) target = $region48
        $region47: #{tpu_custom_call.1} parent=43 // pred_region
          %s293 = sand.u32 %s35, 1
          %s294 = scalar_lea.sflag [#allocation3], %s293
          %s295 = sand.u32 %s35, 1
          %s296 = smul.addr %s295, 16
          %s297 = scalar_lea.vmem [#allocation2], %s296
          %s299 = ssub.s32 256, 256
          %300 = vsyncadd %s294, %s299
          %s301 = smul.addr %s25, 2
          %s302 = smul.addr %s301, 128
          %s303 = scalar_lea.hbm %s0, %s302
          %s304 = sshll.u32 %s297, 4
          %s305 = int_to_ptr.vmem [resolvable:$true] %s304
          %310 = dma.hbm_to_vmem [thread:$0]  %s303, 256, %s305, %s294, 128, 128, 8
        $region48: #{tpu_custom_call.1} parent=43 // pred_fallthru
          _
      $region44: #{tpu_custom_call.1} parent=5 // pred_fallthru
        _
      %p311 = scmp.le.s32.totalorder 1, %s25
      %p312 = scmp.lt.s32.totalorder %s25, 3
      %p313 = pnand %p311, %p312
      %p314 = pneg %p313
      // Predicated region
      $region49: #{tpu_custom_call.1} parent=5 // pred_check
        _
      $region50: #{tpu_custom_call.1} parent=5 // pred_check_branch
        %316 = sbr.rel (%p313) target = $region52
      $region51: #{tpu_custom_call.1} parent=5 // pred_region
        %s317 = ssub.s32 %s25, 1
        %s318 = sand.u32 %s38, 1
        %s319 = scalar_lea.sflag [#allocation3], %s318
        %s320 = sand.u32 %s38, 1
        %s321 = smul.addr %s320, 16
        %s322 = scalar_lea.vmem [#allocation2], %s321
        // Predicated region
        $region53: #{tpu_custom_call.1} parent=51 // pred_check
          %p323 = pneg %p51
        $region54: #{tpu_custom_call.1} parent=51 // pred_check_branch
          %325 = sbr.rel (%p323) target = $region56
        $region55: #{tpu_custom_call.1} parent=51 // pred_region
          %326 = dma.done %s319, 256
        $region56: #{tpu_custom_call.1} parent=51 // pred_fallthru
          _
        %s327 = sand.u32 %s38, 1
        %s328 = scalar_lea.sflag [#allocation3], %s327
        %s329 = sand.u32 %s38, 1
        %s330 = smul.addr %s329, 16
        %s331 = scalar_lea.vmem [#allocation2], %s330
        %p332 = pneg %p51
        %p333 = pneg %p48
        %p334 = pneg %p72
        %p335 = pneg %p69
        %p336 = pneg %p93
        %p337 = pneg %p90
        %p338 = pneg %p114
        %p339 = pneg %p111
        %p340 = pneg %p135
        %p341 = pneg %p132
        %p342 = pneg %p156
        %p343 = pneg %p153
        %p344 = pneg %p177
        %p345 = pneg %p174
        %p346 = pneg %p198
        %p347 = pneg %p195
        %p348 = pneg %p224
        %p349 = pneg %p221
        %s350 = sand.u32 %s211, 1
        %s351 = scalar_lea.sflag [#allocation4], %s350
        %s352 = sand.u32 %s211, 1
        %s353 = smul.addr %s352, 16
        %s354 = scalar_lea.vmem [#allocation5], %s353
        %p355 = pneg %p250
        %p356 = pneg %p247
        %s357 = sand.u32 %s237, 1
        %s358 = scalar_lea.sflag [#allocation7], %s357
        %s359 = sand.u32 %s237, 1
        %s360 = smul.addr %s359, 16
        %s361 = scalar_lea.vmem [#allocation6], %s360
        %v363 = vld [vmem:[%s322] sm:$0xff]
        %v364 = vld [vmem:[%s322 + $0x8] sm:$0xff]
        %vm365 = vcmask 261120
        %v366 = vsel %vm365, %v363, 0.0
        %367 = vadd.xlane.f32.xlu0 %v366
        %v368 = vpop.xlane.xlu0 %367
        %v369 = vsel %vm365, %v364, 0.0
        %370 = vadd.xlane.f32.xlu0 %v369
        %v371 = vpop.xlane.xlu0 %370
        %v372 = vrcp.pop 32.0
        %v373 = vmul.f32 %v368, %v372
        %v374 = vmul.f32 %v371, %v372
        %v375 = vsub.f32 %v363, %v373
        %v376 = vsub.f32 %v364, %v374
        %v377 = vmul.f32 %v375, %v375
        %v378 = vmul.f32 %v376, %v376
        %v379 = vsel %vm365, %v377, 0.0
        %380 = vadd.xlane.f32.xlu0 %v379
        %v381 = vpop.xlane.xlu0 %380
        %v382 = vsel %vm365, %v378, 0.0
        %383 = vadd.xlane.f32.xlu0 %v382
        %v384 = vpop.xlane.xlu0 %383
        %v385 = vmul.f32 %v381, %v372
        %v386 = vmul.f32 %v384, %v372
        %v387 = vadd.f32 %v385, 1e-05
        %v388 = vadd.f32 %v386, 1e-05
        %v389 = vrsqrt.pop %v387
        %v390 = vrsqrt.pop %v388
        %v391 = vmul.f32 %v375, %v389
        %v392 = vmul.f32 %v376, %v390
        %v393 = vld [vmem:[%s1] sm:$0x1]
        %v395 = vlaneseq
        %v396 = vshrl.u32 %v395, 7
        %v397 = vsub.s32 0, %v396
        %v398 = vrot.slane %v393, %v397
        %v400 = vmul.f32 %v391, %v398
        %v401 = vmul.f32 %v392, %v398
        %v402 = vld [vmem:[%s2] sm:$0x1]
        %v404 = vlaneseq
        %v405 = vshrl.u32 %v404, 7
        %v406 = vsub.s32 0, %v405
        %v407 = vrot.slane %v402, %v406
        %v409 = vadd.f32 %v400, %v407
        %v410 = vadd.f32 %v401, %v407
        %v411 = vpack.c.bf16 %v410, %v409
        %v412 = vld [vmem:[%s3] sm:$0xf]
        %v413 = vld [vmem:[%s3 + $0x4] sm:$0xf]
        %v414 = vld [vmem:[%s3 + $0x8] sm:$0xf]
        %v415 = vld [vmem:[%s3 + $0xc] sm:$0xf]
        %v416 = vld [vmem:[%s4] sm:$0x1]
        %v418 = vlaneseq
        %v419 = vshrl.u32 %v418, 7
        %v420 = vsub.s32 0, %v419
        %v421 = vrot.slane %v416, %v420
        %v427 = vunpack.c.l.b16 %v412
        %v428 = vunpack.c.l.b16 %v413
        %v429 = vunpack.c.l.b16 %v414
        %v430 = vunpack.c.l.b16 %v415
        %v431 = vpack.c.b16 %v428, %v427
        %v432 = vpack.c.b16 %v430, %v429
        %v436 = vsel %vm365, %v411, 0
        %438 = vmatprep.subr.bf16.mxu0 0
        %439 = vmatpush1.bf16.msra.mxu0 %v431
        %440 = vmatprep.subr.bf16.mxu0 0
        %441 = vmatpush1.bf16.msra.mxu0 %v432
        %442 = vmatprep.subr.bf16.mxu0 0
        %443 = vmatpush1.bf16.msra.mxu0 0
        %444 = vmatprep.subr.bf16.mxu0 0
        %445 = vmatpush1.bf16.msra.mxu0 0
        %446 = vmatprep.subr.bf16.mxu0 0
        %447 = vmatpush1.bf16.msra.mxu0 0
        %448 = vmatprep.subr.bf16.mxu0 0
        %449 = vmatpush1.bf16.msra.mxu0 0
        %450 = vmatprep.subr.bf16.mxu0 0
        %451 = vmatpush1.bf16.msra.mxu0 0
        %452 = vmatprep.subr.bf16.mxu0 0
        %453 = vmatpush1.bf16.msra.mxu0 0
        %454 = vmatprep.subr.bf16.mxu0 0
        %455 = vmatpush1.bf16.msra.mxu0 0
        %456 = vmatprep.subr.bf16.mxu0 0
        %457 = vmatpush1.bf16.msra.mxu0 0
        %458 = vmatprep.subr.bf16.mxu0 0
        %459 = vmatpush1.bf16.msra.mxu0 0
        %460 = vmatprep.subr.bf16.mxu0 0
        %461 = vmatpush1.bf16.msra.mxu0 0
        %462 = vmatprep.subr.bf16.mxu0 0
        %463 = vmatpush1.bf16.msra.mxu0 0
        %464 = vmatprep.subr.bf16.mxu0 0
        %465 = vmatpush1.bf16.msra.mxu0 0
        %466 = vmatprep.subr.bf16.mxu0 0
        %467 = vmatpush1.bf16.msra.mxu0 0
        %468 = vmatprep.subr.bf16.mxu0 0
        %469 = vmatpush1.bf16.msra.mxu0 0
        %470 = vmatprep.mubr.bf16.mxu0 0
        %471 = vmatmul.mubr.bf16.gmra.mrb[0].mxu0 %v436
        %v472 = vpop.f32.mrb[0].mxu0
        %v473 = vadd.f32 %v421, %v472
        %v474 = vpop.f32.mrb[0].mxu0
        %v475 = vpop.f32.mrb[0].mxu0
        %v476 = vadd.f32 %v421, %v475
        %v477 = vpop.f32.mrb[0].mxu0
        %478 = vdwg.mxu0
        %v479 = vpack.c.bf16 %v476, %v473
        %v480 = vld [vmem:[%s5] sm:$0xf]
        %v481 = vld [vmem:[%s5 + $0x4] sm:$0xf]
        %v482 = vld [vmem:[%s7] sm:$0x1]
        %v484 = vlaneseq
        %v485 = vshrl.u32 %v484, 7
        %v486 = vsub.s32 0, %v485
        %v487 = vrot.slane %v482, %v486
        %v491 = vunpack.c.l.b16 %v480
        %v492 = vunpack.c.l.b16 %v481
        %v493 = vpack.c.b16 %v492, %v491
        %vm495 = vcmask 130048
        %v497 = vsel %vm495, %v479, 0
        %499 = vmatprep.subr.bf16.mxu0 0
        %500 = vmatpush1.bf16.msra.mxu0 %v493
        %501 = vmatprep.subr.bf16.mxu0 0
        %502 = vmatpush1.bf16.msra.mxu0 0
        %503 = vmatprep.subr.bf16.mxu0 0
        %504 = vmatpush1.bf16.msra.mxu0 0
        %505 = vmatprep.subr.bf16.mxu0 0
        %506 = vmatpush1.bf16.msra.mxu0 0
        %507 = vmatprep.subr.bf16.mxu0 0
        %508 = vmatpush1.bf16.msra.mxu0 0
        %509 = vmatprep.subr.bf16.mxu0 0
        %510 = vmatpush1.bf16.msra.mxu0 0
        %511 = vmatprep.subr.bf16.mxu0 0
        %512 = vmatpush1.bf16.msra.mxu0 0
        %513 = vmatprep.subr.bf16.mxu0 0
        %514 = vmatpush1.bf16.msra.mxu0 0
        %515 = vmatprep.subr.bf16.mxu0 0
        %516 = vmatpush1.bf16.msra.mxu0 0
        %517 = vmatprep.subr.bf16.mxu0 0
        %518 = vmatpush1.bf16.msra.mxu0 0
        %519 = vmatprep.subr.bf16.mxu0 0
        %520 = vmatpush1.bf16.msra.mxu0 0
        %521 = vmatprep.subr.bf16.mxu0 0
        %522 = vmatpush1.bf16.msra.mxu0 0
        %523 = vmatprep.subr.bf16.mxu0 0
        %524 = vmatpush1.bf16.msra.mxu0 0
        %525 = vmatprep.subr.bf16.mxu0 0
        %526 = vmatpush1.bf16.msra.mxu0 0
        %527 = vmatprep.subr.bf16.mxu0 0
        %528 = vmatpush1.bf16.msra.mxu0 0
        %529 = vmatprep.subr.bf16.mxu0 0
        %530 = vmatpush1.bf16.msra.mxu0 0
        %531 = vmatprep.mubr.bf16.mxu0 0
        %532 = vmatmul.mubr.bf16.gmra.mrb[0].mxu0 %v497
        %v533 = vpop.f32.mrb[0].mxu0
        %v534 = vadd.f32 %v487, %v533
        %v535 = vpop.f32.mrb[0].mxu0
        %v536 = vpop.f32.mrb[0].mxu0
        %v537 = vadd.f32 %v487, %v536
        %v538 = vpop.f32.mrb[0].mxu0
        %539 = vdwg.mxu0
        %vm540 = vcmask 523264
        %541 = vst.msk [vmem:[%s354] sm:$0xff] %vm540, %v534
        %542 = vst.msk [vmem:[%s354 + $0x8] sm:$0xff] %vm540, %v537
        %v543 = vld [vmem:[%s6] sm:$0xf]
        %v544 = vld [vmem:[%s6 + $0x4] sm:$0xf]
        %v547 = vunpack.c.l.b16 %v543
        %v548 = vunpack.c.l.b16 %v544
        %v549 = vpack.c.b16 %v548, %v547
        %551 = vmatprep.subr.bf16.mxu0 0
        %552 = vmatpush1.bf16.msra.mxu0 %v549
        %553 = vmatprep.subr.bf16.mxu0 0
        %554 = vmatpush1.bf16.msra.mxu0 0
        %555 = vmatprep.subr.bf16.mxu0 0
        %556 = vmatpush1.bf16.msra.mxu0 0
        %557 = vmatprep.subr.bf16.mxu0 0
        %558 = vmatpush1.bf16.msra.mxu0 0
        %559 = vmatprep.subr.bf16.mxu0 0
        %560 = vmatpush1.bf16.msra.mxu0 0
        %561 = vmatprep.subr.bf16.mxu0 0
        %562 = vmatpush1.bf16.msra.mxu0 0
        %563 = vmatprep.subr.bf16.mxu0 0
        %564 = vmatpush1.bf16.msra.mxu0 0
        %565 = vmatprep.subr.bf16.mxu0 0
        %566 = vmatpush1.bf16.msra.mxu0 0
        %567 = vmatprep.subr.bf16.mxu0 0
        %568 = vmatpush1.bf16.msra.mxu0 0
        %569 = vmatprep.subr.bf16.mxu0 0
        %570 = vmatpush1.bf16.msra.mxu0 0
        %571 = vmatprep.subr.bf16.mxu0 0
        %572 = vmatpush1.bf16.msra.mxu0 0
        %573 = vmatprep.subr.bf16.mxu0 0
        %574 = vmatpush1.bf16.msra.mxu0 0
        %575 = vmatprep.subr.bf16.mxu0 0
        %576 = vmatpush1.bf16.msra.mxu0 0
        %577 = vmatprep.subr.bf16.mxu0 0
        %578 = vmatpush1.bf16.msra.mxu0 0
        %579 = vmatprep.subr.bf16.mxu0 0
        %580 = vmatpush1.bf16.msra.mxu0 0
        %581 = vmatprep.subr.bf16.mxu0 0
        %582 = vmatpush1.bf16.msra.mxu0 0
        %583 = vmatprep.mubr.bf16.mxu0 0
        %584 = vmatmul.mubr.bf16.gmra.mrb[0].mxu0 %v497
        %v585 = vpop.f32.mrb[0].mxu0
        %v586 = vadd.f32 0.0, %v585
        %v587 = vpop.f32.mrb[0].mxu0
        %v588 = vpop.f32.mrb[0].mxu0
        %v589 = vadd.f32 0.0, %v588
        %v590 = vpop.f32.mrb[0].mxu0
        %591 = vdwg.mxu0
        %592 = vst.msk [vmem:[%s361] sm:$0xff] %vm540, %v586
        %593 = vst.msk [vmem:[%s361 + $0x8] sm:$0xff] %vm540, %v589
        %s594 = sand.u32 %s211, 1
        %s595 = scalar_lea.sflag [#allocation4], %s594
        %s596 = sand.u32 %s211, 1
        %s597 = smul.addr %s596, 16
        %s598 = scalar_lea.vmem [#allocation5], %s597
        %s599 = sand.u32 %s237, 1
        %s600 = scalar_lea.sflag [#allocation7], %s599
        %s601 = sand.u32 %s237, 1
        %s602 = smul.addr %s601, 16
        %s603 = scalar_lea.vmem [#allocation6], %s602
        // Predicated region
        $region57: #{tpu_custom_call.1} parent=51 // pred_check
          %p604 = pneg %p221
        $region58: #{tpu_custom_call.1} parent=51 // pred_check_branch
          %606 = sbr.rel (%p604) target = $region60
        $region59: #{tpu_custom_call.1} parent=51 // pred_region
          %s608 = ssub.s32 256, 256
          %609 = vsyncadd %s595, %s608
          %s610 = smul.addr %s30, 2
          %s611 = smul.addr %s610, 128
          %s612 = scalar_lea.hbm %s8, %s611
          %s613 = sshll.u32 %s598, 4
          %s614 = int_to_ptr.vmem [resolvable:$true] %s613
          %619 = dma.vmem_to_hbm [thread:$0]  %s614, 256, %s612, %s595, 128, 128, 8
        $region60: #{tpu_custom_call.1} parent=51 // pred_fallthru
          _
        // Predicated region
        $region61: #{tpu_custom_call.1} parent=51 // pred_check
          %p620 = pneg %p247
        $region62: #{tpu_custom_call.1} parent=51 // pred_check_branch
          %622 = sbr.rel (%p620) target = $region64
        $region63: #{tpu_custom_call.1} parent=51 // pred_region
          %s624 = ssub.s32 256, 256
          %625 = vsyncadd %s600, %s624
          %s626 = smul.addr %s30, 2
          %s627 = smul.addr %s626, 128
          %s628 = scalar_lea.hbm %s9, %s627
          %s629 = sshll.u32 %s603, 4
          %s630 = int_to_ptr.vmem [resolvable:$true] %s629
          %635 = dma.vmem_to_hbm [thread:$0]  %s630, 256, %s628, %s600, 128, 128, 8
        $region64: #{tpu_custom_call.1} parent=51 // pred_fallthru
          _
      $region52: #{tpu_custom_call.1} parent=5 // pred_fallthru
        _
      %p636 = scmp.le.s32.totalorder 2, %s25
      // Predicated region
      $region65: #{tpu_custom_call.1} parent=5 // pred_check
        %p637 = pneg %p636
      $region66: #{tpu_custom_call.1} parent=5 // pred_check_branch
        %639 = sbr.rel (%p637) target = $region68
      $region67: #{tpu_custom_call.1} parent=5 // pred_region
        %s640 = ssub.s32 %s25, 2
        // Predicated region
        $region69: #{tpu_custom_call.1} parent=67 // pred_check
          %p641 = pneg %p227
        $region70: #{tpu_custom_call.1} parent=67 // pred_check_branch
          %643 = sbr.rel (%p641) target = $region72
        $region71: #{tpu_custom_call.1} parent=67 // pred_region
          %s644 = sand.u32 %s212, 1
          %s645 = scalar_lea.sflag [#allocation4], %s644
          %s646 = sand.u32 %s212, 1
          %s647 = smul.addr %s646, 16
          %s648 = scalar_lea.vmem [#allocation5], %s647
          %649 = dma.done %s645, 256
        $region72: #{tpu_custom_call.1} parent=67 // pred_fallthru
          _
        // Predicated region
        $region73: #{tpu_custom_call.1} parent=67 // pred_check
          %p650 = pneg %p253
        $region74: #{tpu_custom_call.1} parent=67 // pred_check_branch
          %652 = sbr.rel (%p650) target = $region76
        $region75: #{tpu_custom_call.1} parent=67 // pred_region
          %s653 = sand.u32 %s238, 1
          %s654 = scalar_lea.sflag [#allocation7], %s653
          %s655 = sand.u32 %s238, 1
          %s656 = smul.addr %s655, 16
          %s657 = scalar_lea.vmem [#allocation6], %s656
          %658 = dma.done %s654, 256
        $region76: #{tpu_custom_call.1} parent=67 // pred_fallthru
          _
      $region68: #{tpu_custom_call.1} parent=5 // pred_fallthru
        _
    $region6: #{tpu_custom_call.1} parent=1 // loop_footer
      %s29 = sadd.s32 1, %s25
    $region7: #{tpu_custom_call.1} parent=1 // loop_footer_branch
      %24 = sbr.rel target = $region3
    $region8: #{tpu_custom_call.1} parent=1 // loop_exit
      _
    %659 = vsyncpa [#allocation3], 1
    %s660 = scalar_lea.sflag [#allocation3], 1
    %661 = vsyncpa %s660, 1
    %662 = vsyncpa [#allocation4], 1
    %s663 = scalar_lea.sflag [#allocation4], 1
    %664 = vsyncpa %s663, 1
    %665 = vsyncpa [#allocation7], 1
    %s666 = scalar_lea.sflag [#allocation7], 1
    %667 = vsyncpa %s666, 1

</llo_original>
